<compile_context>
chip_gen: v5e
topology: v5e:2x2
jax: 0.10.0
libtpu: 0.0.40
codegen_flags: <defaults>
</compile_context>

<pallas_src>
import jax
import jax.numpy as jnp
from jax.experimental import pallas as pl
from jax.experimental.pallas import tpu as pltpu


def _embed_kernel(ids_ref, tok_ref, pos_ref, out_ref):
    """Compute one (1, TILE_S, E) output tile.

    ids_ref: (1, TILE_S, 1) int32  -- token ids for this (batch, seq-tile).
    tok_ref: (V, E)                -- full token-embedding table, VMEM-resident.
    pos_ref: (MAX_SEQ, E)          -- full position-embedding table, VMEM-resident.
    out_ref: (1, TILE_S, E)
    """
    tile_s = out_ref.shape[1]
    vocab = tok_ref.shape[0]

    ids = ids_ref[0]                                              # (TILE_S, 1) int32
    # One-hot gather on the MXU: (TILE_S, V) @ (V, E) -> (TILE_S, E).
    # Out-of-range ids simply yield a zero row (no OOB memory access).
    iota_v = jax.lax.broadcasted_iota(jnp.int32, (tile_s, vocab), 1)
    onehot = (ids == iota_v).astype(tok_ref.dtype)                # (TILE_S, V)
    tok = jnp.dot(
        onehot,
        tok_ref[...],
        preferred_element_type=jnp.float32,
        precision=jax.lax.Precision.HIGHEST,  # keep the f32 row-selection exact
    )                                                             # (TILE_S, E) f32

    # Position rows for this sequence tile, sliced from the resident table.
    start = pl.multiple_of(pl.program_id(1) * tile_s, tile_s)
    pos = pos_ref[pl.ds(start, tile_s), :].astype(jnp.float32)    # (TILE_S, E)

    out_ref[...] = (tok + pos).astype(out_ref.dtype).reshape(out_ref.shape)


def _pick_seq_tile(seq_len):
    for t in (512, 256, 128):
        if seq_len % t == 0:
            return t
    return seq_len  # small sequences: one full-extent tile


def gpt2_embedding(input_ids, token_table, pos_table):
    B, S = input_ids.shape
    V, E = token_table.shape
    max_seq_len, E2 = pos_table.shape
    assert E == E2, "embedding sizes must match"
    assert token_table.dtype == pos_table.dtype, "tables must share a dtype"
    assert S == max_seq_len, "forward requires seq len == max_seq_len (expand_as)"

    tile_s = _pick_seq_tile(S)
    num_s_tiles = S // tile_s

    itemsize = jnp.dtype(token_table.dtype).itemsize
    tok_bytes = V * E * itemsize
    pos_bytes = max_seq_len * E * itemsize
    # TODO(synk): large-vocab path (token table >> VMEM) needs a manual DMA gather.
    assert tok_bytes + pos_bytes <= 24 * 1024 * 1024, (
        "resident-table path requires token+position tables to fit in VMEM")

    out_tile_bytes = tile_s * E * itemsize
    ids_tile_bytes = tile_s * 128 * 4  # (TILE_S, 1) int32 tile, lane-padded to 128
    vmem_need = 2 * (tok_bytes + pos_bytes + out_tile_bytes + ids_tile_bytes)
    vmem_limit = None
    if vmem_need > (16 << 20):  # above v5e default scoped VMEM: request explicitly
        vmem_limit = min(vmem_need + (4 << 20), 64 << 20)

    ids3 = input_ids.astype(jnp.int32).reshape(B, S, 1)

    grid_spec = pltpu.PrefetchScalarGridSpec(
        num_scalar_prefetch=0,
        grid=(B, num_s_tiles),
        in_specs=[
            # token ids for this (batch, seq-tile)
            pl.BlockSpec((1, tile_s, 1), lambda b, si: (b, si, 0)),
            # full token table, resident in VMEM (constant block index -> one fetch)
            pl.BlockSpec((V, E), lambda b, si: (0, 0)),
            # full position table, resident in VMEM (constant block index -> one fetch)
            pl.BlockSpec((max_seq_len, E), lambda b, si: (0, 0)),
        ],
        out_specs=pl.BlockSpec((1, tile_s, E), lambda b, si: (b, si, 0)),
    )

    return pl.pallas_call(
        _embed_kernel,
        out_shape=jax.ShapeDtypeStruct((B, S, E), token_table.dtype),
        grid_spec=grid_spec,
        compiler_params=pltpu.CompilerParams(
            dimension_semantics=("parallel", "parallel"),
            vmem_limit_bytes=vmem_limit,
        ),
    )(ids3, token_table, pos_table)


if __name__ == "__main__":
    # Small config consistent with the module: vocab=64, embed=128, max_seq=8, batch=2.
    vocab_size = 64
    embedding_size = 128
    max_seq_len = 8
    batch = 2

    key = jax.random.PRNGKey(0)
    k_tok, k_pos, k_ids = jax.random.split(key, 3)

    # nn.Embedding default init: N(0, 1)
    token_table = jax.random.normal(k_tok, (vocab_size, embedding_size), jnp.float32)
    pos_table = jax.random.normal(k_pos, (max_seq_len, embedding_size), jnp.float32)
    input_ids = jax.random.randint(k_ids, (batch, max_seq_len), 0, vocab_size, jnp.int32)

    out = gpt2_embedding(input_ids, token_table, pos_table)
    out = jax.block_until_ready(out)

    # Pure-JAX reference of the PyTorch forward.
    ref = token_table[input_ids] + pos_table[jnp.arange(max_seq_len)][None, :, :]
    assert out.shape == (batch, max_seq_len, embedding_size)
    max_err = float(jnp.max(jnp.abs(out - ref)))
    assert jnp.allclose(out, ref, rtol=1e-4, atol=1e-4), f"max abs err = {max_err}"

    print("KERNEL_OK")
</pallas_src>

<mosaic_0001>
module attributes {stable_mosaic.version = 11 : i64} {
  func.func @_embed_kernel(%arg0: i32, %arg1: i32, %arg2: memref<1x8x1xi32, #tpu.memory_space<vmem>>, %arg3: memref<64x128xf32, #tpu.memory_space<vmem>>, %arg4: memref<8x128xf32, #tpu.memory_space<vmem>>, %arg5: memref<1x8x128xf32, #tpu.memory_space<vmem>>) attributes {dimension_semantics = [#tpu.dimension_semantics<parallel>, #tpu.dimension_semantics<parallel>], iteration_bounds = array<i64: 2, 1>, scalar_prefetch = 0 : i64, scratch_operands = 0 : i64, tpu.core_type = #tpu.core_type<tc>, window_params = [{transform_indices = @transform_0, window_bounds = array<i64: 1, 8, 1>}, {pipeline_mode = #tpu.pipeline_mode<synchronous>, transform_indices = @transform_1, window_bounds = array<i64: 64, 128>}, {pipeline_mode = #tpu.pipeline_mode<synchronous>, transform_indices = @transform_2, window_bounds = array<i64: 8, 128>}, {transform_indices = @transform_3, window_bounds = array<i64: 1, 8, 128>}]} {
    %c0 = arith.constant 0 : index
    %c0_0 = arith.constant 0 : index
    %c0_1 = arith.constant 0 : index
    %0 = vector.load %arg2[%c0, %c0_0, %c0_1] : memref<1x8x1xi32, #tpu.memory_space<vmem>>, vector<1x8x1xi32>
    %1 = vector.shape_cast %0 : vector<1x8x1xi32> to vector<8x1xi32>
    %2 = tpu.iota {dimensions = array<i32: 1>} : vector<8x64xi32>
    %3 = vector.broadcast %1 : vector<8x1xi32> to vector<8x64xi32>
    %4 = arith.cmpi eq, %3, %2 : vector<8x64xi32>
    %5 = arith.extui %4 : vector<8x64xi1> to vector<8x64xi32>
    %6 = arith.sitofp %5 : vector<8x64xi32> to vector<8x64xf32>
    %c0_2 = arith.constant 0 : index
    %c0_3 = arith.constant 0 : index
    %7 = vector.load %arg3[%c0_2, %c0_3] : memref<64x128xf32, #tpu.memory_space<vmem>>, vector<64x128xf32>
    %cst = arith.constant dense<0.000000e+00> : vector<8x128xf32>
    %8 = tpu.matmul %6, %7, %cst {dimension_numbers = #tpu.dot_dimension_numbers<[1], [0], [0], [1], [0, 0, 1, 1], [], []>, precision = #tpu.contract_precision<fp32>} : vector<8x64xf32>, vector<64x128xf32>, vector<8x128xf32> -> vector<8x128xf32>
    %c8_i32 = arith.constant 8 : i32
    %9 = arith.muli %arg1, %c8_i32 : i32
    %10 = tpu.assume_multiple %9, 8 : i32
    %11 = arith.index_cast %10 : i32 to index
    %c0_4 = arith.constant 0 : index
    %12 = vector.load %arg4[%11, %c0_4] : memref<8x128xf32, #tpu.memory_space<vmem>>, vector<8x128xf32>
    %13 = arith.addf %8, %12 : vector<8x128xf32>
    %14 = vector.shape_cast %13 : vector<8x128xf32> to vector<1x8x128xf32>
    %c0_5 = arith.constant 0 : index
    %c0_6 = arith.constant 0 : index
    %c0_7 = arith.constant 0 : index
    %15 = vector.load %arg5[%c0_5, %c0_6, %c0_7] : memref<1x8x128xf32, #tpu.memory_space<vmem>>, vector<1x8x128xf32>
    tpu.vector_store %arg5[%c0_5, %c0_6, %c0_7], %14 {strides = array<i32>} : memref<1x8x128xf32, #tpu.memory_space<vmem>>, vector<1x8x128xf32>,
    return
  }
  func.func @transform_0(%arg0: i32, %arg1: i32) -> (i32, i32, i32) {
    %c0_i32 = arith.constant 0 : i32
    %c0_i32_0 = arith.constant 0 : i32
    return %arg0, %arg1, %c0_i32 : i32, i32, i32
  }
  func.func @transform_1(%arg0: i32, %arg1: i32) -> (i32, i32) {
    %c0_i32 = arith.constant 0 : i32
    %c0_i32_0 = arith.constant 0 : i32
    %c0_i32_1 = arith.constant 0 : i32
    return %c0_i32, %c0_i32_0 : i32, i32
  }
  func.func @transform_2(%arg0: i32, %arg1: i32) -> (i32, i32) {
    %c0_i32 = arith.constant 0 : i32
    %c0_i32_0 = arith.constant 0 : i32
    %c0_i32_1 = arith.constant 0 : i32
    return %c0_i32, %c0_i32_0 : i32, i32
  }
  func.func @transform_3(%arg0: i32, %arg1: i32) -> (i32, i32, i32) {
    %c0_i32 = arith.constant 0 : i32
    %c0_i32_0 = arith.constant 0 : i32
    return %arg0, %arg1, %c0_i32 : i32, i32, i32
  }
}

</mosaic_0001>

<llo_original>
// kernel: tpu_custom_call.1
$region0: #{tpu_custom_call.1}
  #allocation0 [shape = 'u32[]', space=smem, size = 0x4, offset = 0x4, fixed_abs, tag = 'smem constant byte address 0x4 - core index']
  #allocation1 [shape = 'u32[72,128]{1,0:T(1,128)}', space=vmem, size = 0x9000, scoped, tag = 'internal scratch']
  %s0 = inlined_call_operand.vmem [shape: s32[2,8,1], index: 0, kind: input, shape index: {}]
  %s1 = inlined_call_operand.hbm [shape: f32[64,128], index: 1, kind: input, shape index: {}]
  %s2 = inlined_call_operand.vmem [shape: f32[8,128], index: 2, kind: input, shape index: {}]
  %s3 = inlined_call_operand.hbm [shape: f32[2,8,128], index: 3, kind: output, shape index: {}]
  %s4 = sld [smem:[#allocation0]]
  $region49: #{tpu_custom_call.1} parent=0
    _
  %s6 = ssub.s32 1, %s4
  %s7 = scalar_select 0, %s6, %s4
  $region1: #{tpu_custom_call.1} parent=0
    #allocation2 [shape = 'u8[32768]{0}', space=vmem, size = 0x8000, scoped, tag = 'input window, operand 1, single buffered']
    #allocation3 [shape = 's32[2]{0}', space=sflag, size = 0x8, scoped, tag = 'scoped memory for tpu_custom_call.1']
    #allocation4 [shape = 's32[2]{0}', space=sflag, size = 0x8, scoped, tag = 'scoped memory for tpu_custom_call.1']
    #allocation5 [shape = 'u8[8192]{0}', space=vmem, size = 0x2000, scoped, tag = 'output window, operand 0']
    %8 = vsyncpa [#allocation3], 0
    %9 = vsyncpa [#allocation4], 0
    %s10 = scalar_lea.sflag [#allocation4], 1
    %11 = vsyncpa %s10, 0
    loop: start=0, step=1, limit=4
    $region2: #{tpu_custom_call.1} parent=1 // loop_pre_header
      _
    $region3: #{tpu_custom_call.1} parent=1 // loop_header
      %s13 = sphi 0, %s17
      %p14 = scmp.ge.s32.totalorder %s13, 4
      %s20 = sphi 0, %s32
      %s21 = sphi 0, %s28
      %s22 = sphi 0, %s20
      %s23 = sphi 0, %s21
      %s24 = sphi 0, %s22
      %s25 = sphi 0, %s23
      %s37 = sphi 0, %s39
      %s40 = sphi 0, %s37
      %s41 = sphi 0, %s40
      %s57 = sphi 0, %s41
      %s61 = sphi 0, %s61
      %s63 = sphi 0, %s61
      %s64 = sphi 0, %s63
      %s78 = sphi 0, %s64
      %s82 = sphi 0, %s82
      %s84 = sphi 0, %s82
      %s85 = sphi 0, %s84
      %s99 = sphi 0, %s85
      %s107 = sphi 0, %s109
      %s110 = sphi 0, %s107
      %s111 = sphi 0, %s110
      %s127 = sphi 0, %s111
    $region4: #{tpu_custom_call.1} parent=1 // loop_header_branch
      %16 = sbr.rel (%p14) target = $region8
    $region5: #{tpu_custom_call.1} parent=1 // loop_body
      %s18 = ssub.s32 %s13, 1
      %s19 = ssub.s32 %s13, 2
      %s26 = sadd.s32 1, %s21
      %p27 = scmp.ge.s32.totalorder %s26, 1
      %s28 = scalar_select %p27, 0, %s26
      %s29 = sadd.s32 1, %s20
      %s30 = scalar_select %p27, %s29, %s20
      %p31 = scmp.ge.s32.totalorder %s30, 2
      %s32 = scalar_select %p31, 0, %s30
      %s33 = ssub.s32 %s20, %s32
      %s34 = ssub.s32 %s21, %s28
      %s35 = sor.u32 %s33, %s34
      %p36 = scmp.eq.s32.totalorder %s35, 0
      %s38 = sadd.s32 %s37, 1
      %s39 = scalar_select %p36, %s37, %s38
      %p42 = pneg %p36
      %p43 = scmp.eq.s32.totalorder %s13, 1
      %p44 = por %p42, %p43
      %p45 = scmp.ne.s32.totalorder %s37, %s40
      %p46 = scmp.eq.s32.totalorder %s13, 0
      %p47 = por %p45, %p46
      %p48 = scmp.ne.s32.totalorder %s37, %s40
      %p49 = scmp.eq.s32.totalorder %s18, 1
      %p50 = por %p48, %p49
      %p51 = scmp.ne.s32.totalorder %s40, %s41
      %p52 = scmp.eq.s32.totalorder %s18, 0
      %p53 = por %p51, %p52
      %p54 = scmp.ne.s32.totalorder %s40, %s41
      %p55 = scmp.eq.s32.totalorder %s19, 1
      %p56 = por %p54, %p55
      %p58 = scmp.ne.s32.totalorder %s41, %s57
      %p59 = scmp.eq.s32.totalorder %s19, 0
      %p60 = por %p58, %p59
      %s62 = sadd.s32 %s61, 1
      %p65 = scmp.eq.s32.totalorder %s13, 1
      %p66 = scmp.ne.s32.totalorder %s61, %s63
      %p67 = scmp.eq.s32.totalorder %s13, 0
      %p68 = por %p66, %p67
      %p69 = scmp.ne.s32.totalorder %s61, %s63
      %p70 = scmp.eq.s32.totalorder %s18, 1
      %p71 = por %p69, %p70
      %p72 = scmp.ne.s32.totalorder %s63, %s64
      %p73 = scmp.eq.s32.totalorder %s18, 0
      %p74 = por %p72, %p73
      %p75 = scmp.ne.s32.totalorder %s63, %s64
      %p76 = scmp.eq.s32.totalorder %s19, 1
      %p77 = por %p75, %p76
      %p79 = scmp.ne.s32.totalorder %s64, %s78
      %p80 = scmp.eq.s32.totalorder %s19, 0
      %p81 = por %p79, %p80
      %s83 = sadd.s32 %s82, 1
      %p86 = scmp.eq.s32.totalorder %s13, 1
      %p87 = scmp.ne.s32.totalorder %s82, %s84
      %p88 = scmp.eq.s32.totalorder %s13, 0
      %p89 = por %p87, %p88
      %p90 = scmp.ne.s32.totalorder %s82, %s84
      %p91 = scmp.eq.s32.totalorder %s18, 1
      %p92 = por %p90, %p91
      %p93 = scmp.ne.s32.totalorder %s84, %s85
      %p94 = scmp.eq.s32.totalorder %s18, 0
      %p95 = por %p93, %p94
      %p96 = scmp.ne.s32.totalorder %s84, %s85
      %p97 = scmp.eq.s32.totalorder %s19, 1
      %p98 = por %p96, %p97
      %p100 = scmp.ne.s32.totalorder %s85, %s99
      %p101 = scmp.eq.s32.totalorder %s19, 0
      %p102 = por %p100, %p101
      %s103 = ssub.s32 %s20, %s32
      %s104 = ssub.s32 %s21, %s28
      %s105 = sor.u32 %s103, %s104
      %p106 = scmp.eq.s32.totalorder %s105, 0
      %s108 = sadd.s32 %s107, 1
      %s109 = scalar_select %p106, %s107, %s108
      %p112 = pneg %p106
      %p113 = scmp.eq.s32.totalorder %s13, 1
      %p114 = por %p112, %p113
      %p115 = scmp.ne.s32.totalorder %s107, %s110
      %p116 = scmp.eq.s32.totalorder %s13, 0
      %p117 = por %p115, %p116
      %p118 = scmp.ne.s32.totalorder %s107, %s110
      %p119 = scmp.eq.s32.totalorder %s18, 1
      %p120 = por %p118, %p119
      %p121 = scmp.ne.s32.totalorder %s110, %s111
      %p122 = scmp.eq.s32.totalorder %s18, 0
      %p123 = por %p121, %p122
      %p124 = scmp.ne.s32.totalorder %s110, %s111
      %p125 = scmp.eq.s32.totalorder %s19, 1
      %p126 = por %p124, %p125
      %p128 = scmp.ne.s32.totalorder %s111, %s127
      %p129 = scmp.eq.s32.totalorder %s19, 0
      %p130 = por %p128, %p129
      %p131 = scmp.le.s32.totalorder 1, %s13
      %p132 = scmp.lt.s32.totalorder %s13, 3
      %p133 = pnand %p131, %p132
      %p134 = pneg %p133
      // Predicated region
      $region9: #{tpu_custom_call.1} parent=5 // pred_check
        _
      $region10: #{tpu_custom_call.1} parent=5 // pred_check_branch
        %136 = sbr.rel (%p133) target = $region12
      $region11: #{tpu_custom_call.1} parent=5 // pred_region
        %s137 = ssub.s32 %s13, 1
        // Predicated region
        $region13: #{tpu_custom_call.1} parent=11 // pred_check
          %p138 = pneg %p74
        $region14: #{tpu_custom_call.1} parent=11 // pred_check_branch
          %140 = sbr.rel (%p138) target = $region16
        $region15: #{tpu_custom_call.1} parent=11 // pred_region
          %142 = vsyncadd [#allocation3], 0
          %s143 = sshll.u32 %s1, 4
          %s144 = int_to_ptr.hbm [resolvable:$true] %s143
          %s145 = sshll.u32 [#allocation2], 4
          %s146 = int_to_ptr.vmem [resolvable:$true] %s145
          %151 = dma.hbm_to_vmem [thread:$0]  %s144, 1024, %s146, [#allocation3], 128, 128, 8
        $region16: #{tpu_custom_call.1} parent=11 // pred_fallthru
          _
        // Predicated region
        $region17: #{tpu_custom_call.1} parent=11 // pred_check
          %p152 = pneg %p95
        $region18: #{tpu_custom_call.1} parent=11 // pred_check_branch
          %154 = sbr.rel (%p152) target = $region20
        $region19: #{tpu_custom_call.1} parent=11 // pred_region
          _
        $region20: #{tpu_custom_call.1} parent=11 // pred_fallthru
          _
      $region12: #{tpu_custom_call.1} parent=5 // pred_fallthru
        _
      %p155 = scmp.lt.s32.totalorder %s13, 2
      // Predicated region
      $region21: #{tpu_custom_call.1} parent=5 // pred_check
        %p156 = pneg %p155
      $region22: #{tpu_custom_call.1} parent=5 // pred_check_branch
        %158 = sbr.rel (%p156) target = $region24
      $region23: #{tpu_custom_call.1} parent=5 // pred_region
        // Predicated region
        $region25: #{tpu_custom_call.1} parent=23 // pred_check
          %p159 = pneg %p47
        $region26: #{tpu_custom_call.1} parent=23 // pred_check_branch
          %161 = sbr.rel (%p159) target = $region28
        $region27: #{tpu_custom_call.1} parent=23 // pred_region
          %p162 = scmp.lt.s32.totalorder %s20, 1
          %s163 = scalar_select %p162, %s20, 1
          %p164 = scmp.lt.s32.totalorder %s21, 0
          %s165 = scalar_select %p164, %s21, 0
          %s166 = sadd.s32 %s165, %s163
          %s167 = smul.addr %s166, 8
          %s168 = scalar_lea.vmem %s0, %s167
        $region28: #{tpu_custom_call.1} parent=23 // pred_fallthru
          _
      $region24: #{tpu_custom_call.1} parent=5 // pred_fallthru
        _
      %p169 = scmp.le.s32.totalorder 1, %s13
      %p170 = scmp.lt.s32.totalorder %s13, 3
      %p171 = pnand %p169, %p170
      %p172 = pneg %p171
      // Predicated region
      $region29: #{tpu_custom_call.1} parent=5 // pred_check
        _
      $region30: #{tpu_custom_call.1} parent=5 // pred_check_branch
        %174 = sbr.rel (%p171) target = $region32
      $region31: #{tpu_custom_call.1} parent=5 // pred_region
        %s175 = ssub.s32 %s13, 1
        // Predicated region
        $region33: #{tpu_custom_call.1} parent=31 // pred_check
          %p176 = pneg %p74
        $region34: #{tpu_custom_call.1} parent=31 // pred_check_branch
          %178 = sbr.rel (%p176) target = $region36
        $region35: #{tpu_custom_call.1} parent=31 // pred_region
          %180 = dma.done [#allocation3], 1024
        $region36: #{tpu_custom_call.1} parent=31 // pred_fallthru
          _
        %p181 = scmp.lt.s32.totalorder %s22, 1
        %s182 = scalar_select %p181, %s22, 1
        %p183 = scmp.lt.s32.totalorder %s23, 0
        %s184 = scalar_select %p183, %s23, 0
        %s185 = sadd.s32 %s184, %s182
        %s186 = smul.addr %s185, 8
        %s187 = scalar_lea.vmem %s0, %s186
        %p188 = pneg %p53
        %p189 = pneg %p50
        %p190 = pneg %p74
        %p191 = pneg %p71
        %p192 = pneg %p95
        %p193 = pneg %p92
        %p194 = pneg %p123
        %p195 = pneg %p120
        %s196 = sand.u32 %s110, 1
        %s197 = scalar_lea.sflag [#allocation4], %s196
        %s198 = sand.u32 %s110, 1
        %s199 = smul.addr %s198, 8
        %s200 = scalar_lea.vmem [#allocation5], %s199
        %p201 = scmp.lt.s32.totalorder %s22, 1
        %s202 = scalar_select %p201, %s22, 1
        %p203 = scmp.lt.s32.totalorder %s23, 0
        %s204 = scalar_select %p203, %s23, 0
        %s205 = sadd.s32 %s204, %s202
        %s206 = smul.addr %s205, 8
        %s207 = scalar_lea.vmem %s0, %s206
        %v208 = vld [vmem:[%s207] sm:$0xff]
        %v209 = vlaneseq
        %v210 = vand.u32 %v209, 127
        %211 = vset.pattern.permute.xlu0 0
        %212 = vperm.xlu0 %211, %v208
        %v213 = vpop.permute.xlu0 %212
        %vm214 = vcmp.eq.s32.totalorder %v213, %v210
        %v215 = vsel %vm214, 1, 0
        %v216 = vcvt.s32.f32 %v215
        %v217 = vld [vmem:[#allocation2] sm:$0xff]
        %v218 = vld [vmem:[#allocation2 + $0x8] sm:$0xff]
        %v219 = vld [vmem:[#allocation2 + $0x10] sm:$0xff]
        %v220 = vld [vmem:[#allocation2 + $0x18] sm:$0xff]
        %v221 = vld [vmem:[#allocation2 + $0x20] sm:$0xff]
        %v222 = vld [vmem:[#allocation2 + $0x28] sm:$0xff]
        %v223 = vld [vmem:[#allocation2 + $0x30] sm:$0xff]
        %v224 = vld [vmem:[#allocation2 + $0x38] sm:$0xff]
        %s225 = smul.u32 %s23, 8
        %s226 = scalar_lea.vmem %s2, %s225
        %v227 = vld [vmem:[%s226] sm:$0xff]
        %vm228 = vcmask 523264
        %v230 = vsel %vm228, %v216, 0
        %232 = vmatpush.msra.mxu0 0.0
        %233 = vmatpush.msra.mxu0 0.0
        %234 = vmatpush.msra.mxu0 0.0
        %235 = vmatpush.msra.mxu0 0.0
        %236 = vmatpush.msra.mxu0 0.0
        %237 = vmatpush.msra.mxu0 0.0
        %238 = vmatpush.msra.mxu0 0.0
        %239 = vmatpush.msra.mxu0 0.0
        %v240 = vand.u32 %v224, 4294901760
        %241 = vmatpush.msra.mxu0 %v240
        %v242 = vand.u32 %v223, 4294901760
        %243 = vmatpush.msra.mxu0 %v242
        %v244 = vand.u32 %v222, 4294901760
        %245 = vmatpush.msra.mxu0 %v244
        %v246 = vand.u32 %v221, 4294901760
        %247 = vmatpush.msra.mxu0 %v246
        %v248 = vand.u32 %v220, 4294901760
        %249 = vmatpush.msra.mxu0 %v248
        %v250 = vand.u32 %v219, 4294901760
        %251 = vmatpush.msra.mxu0 %v250
        %v252 = vand.u32 %v218, 4294901760
        %253 = vmatpush.msra.mxu0 %v252
        %v254 = vand.u32 %v217, 4294901760
        %255 = vmatpush.msra.mxu0 %v254
        %v256 = vand.u32 %v230, 4294901760
        %v257 = vsub.f32 %v230, %v256
        %v258 = vand.u32 %v257, 4294901760
        %v259 = vsub.f32 %v257, %v258
        %v260 = vand.u32 %v259, 4294901760
        %261 = vmatmul.f32.gmra.mxu0 %v260
        %v262 = vpop.f32.mrf.mxu0
        %v263 = vadd.f32 %v227, %v262
        %264 = vdwg.mxu0
        %265 = vmatpush.msra.mxu0 0.0
        %266 = vmatpush.msra.mxu0 0.0
        %267 = vmatpush.msra.mxu0 0.0
        %268 = vmatpush.msra.mxu0 0.0
        %269 = vmatpush.msra.mxu0 0.0
        %270 = vmatpush.msra.mxu0 0.0
        %271 = vmatpush.msra.mxu0 0.0
        %272 = vmatpush.msra.mxu0 0.0
        %v273 = vand.u32 %v224, 4294901760
        %v274 = vsub.f32 %v224, %v273
        %v275 = vand.u32 %v274, 4294901760
        %v276 = vsub.f32 %v274, %v275
        %v277 = vand.u32 %v276, 4294901760
        %278 = vmatpush.msra.mxu0 %v277
        %v279 = vand.u32 %v223, 4294901760
        %v280 = vsub.f32 %v223, %v279
        %v281 = vand.u32 %v280, 4294901760
        %v282 = vsub.f32 %v280, %v281
        %v283 = vand.u32 %v282, 4294901760
        %284 = vmatpush.msra.mxu0 %v283
        %v285 = vand.u32 %v222, 4294901760
        %v286 = vsub.f32 %v222, %v285
        %v287 = vand.u32 %v286, 4294901760
        %v288 = vsub.f32 %v286, %v287
        %v289 = vand.u32 %v288, 4294901760
        %290 = vmatpush.msra.mxu0 %v289
        %v291 = vand.u32 %v221, 4294901760
        %v292 = vsub.f32 %v221, %v291
        %v293 = vand.u32 %v292, 4294901760
        %v294 = vsub.f32 %v292, %v293
        %v295 = vand.u32 %v294, 4294901760
        %296 = vmatpush.msra.mxu0 %v295
        %v297 = vand.u32 %v220, 4294901760
        %v298 = vsub.f32 %v220, %v297
        %v299 = vand.u32 %v298, 4294901760
        %v300 = vsub.f32 %v298, %v299
        %v301 = vand.u32 %v300, 4294901760
        %302 = vmatpush.msra.mxu0 %v301
        %v303 = vand.u32 %v219, 4294901760
        %v304 = vsub.f32 %v219, %v303
        %v305 = vand.u32 %v304, 4294901760
        %v306 = vsub.f32 %v304, %v305
        %v307 = vand.u32 %v306, 4294901760
        %308 = vmatpush.msra.mxu0 %v307
        %v309 = vand.u32 %v218, 4294901760
        %v310 = vsub.f32 %v218, %v309
        %v311 = vand.u32 %v310, 4294901760
        %v312 = vsub.f32 %v310, %v311
        %v313 = vand.u32 %v312, 4294901760
        %314 = vmatpush.msra.mxu0 %v313
        %v315 = vand.u32 %v217, 4294901760
        %v316 = vsub.f32 %v217, %v315
        %v317 = vand.u32 %v316, 4294901760
        %v318 = vsub.f32 %v316, %v317
        %v319 = vand.u32 %v318, 4294901760
        %320 = vmatpush.msra.mxu0 %v319
        %v321 = vand.u32 %v230, 4294901760
        %322 = vmatmul.f32.gmra.mxu0 %v321
        %v323 = vpop.f32.mrf.mxu0
        %v324 = vadd.f32 %v263, %v323
        %325 = vdwg.mxu0
        %326 = vmatpush.msra.mxu0 0.0
        %327 = vmatpush.msra.mxu0 0.0
        %328 = vmatpush.msra.mxu0 0.0
        %329 = vmatpush.msra.mxu0 0.0
        %330 = vmatpush.msra.mxu0 0.0
        %331 = vmatpush.msra.mxu0 0.0
        %332 = vmatpush.msra.mxu0 0.0
        %333 = vmatpush.msra.mxu0 0.0
        %v334 = vand.u32 %v224, 4294901760
        %v335 = vsub.f32 %v224, %v334
        %336 = vmatpush.msra.mxu0 %v335
        %v337 = vand.u32 %v223, 4294901760
        %v338 = vsub.f32 %v223, %v337
        %339 = vmatpush.msra.mxu0 %v338
        %v340 = vand.u32 %v222, 4294901760
        %v341 = vsub.f32 %v222, %v340
        %342 = vmatpush.msra.mxu0 %v341
        %v343 = vand.u32 %v221, 4294901760
        %v344 = vsub.f32 %v221, %v343
        %345 = vmatpush.msra.mxu0 %v344
        %v346 = vand.u32 %v220, 4294901760
        %v347 = vsub.f32 %v220, %v346
        %348 = vmatpush.msra.mxu0 %v347
        %v349 = vand.u32 %v219, 4294901760
        %v350 = vsub.f32 %v219, %v349
        %351 = vmatpush.msra.mxu0 %v350
        %v352 = vand.u32 %v218, 4294901760
        %v353 = vsub.f32 %v218, %v352
        %354 = vmatpush.msra.mxu0 %v353
        %v355 = vand.u32 %v217, 4294901760
        %v356 = vsub.f32 %v217, %v355
        %357 = vmatpush.msra.mxu0 %v356
        %v358 = vand.u32 %v230, 4294901760
        %v359 = vsub.f32 %v230, %v358
        %360 = vmatmul.f32.gmra.mxu0 %v359
        %v361 = vpop.f32.mrf.mxu0
        %v362 = vadd.f32 %v324, %v361
        %363 = vdwg.mxu0
        %364 = vmatpush.msra.mxu0 0.0
        %365 = vmatpush.msra.mxu0 0.0
        %366 = vmatpush.msra.mxu0 0.0
        %367 = vmatpush.msra.mxu0 0.0
        %368 = vmatpush.msra.mxu0 0.0
        %369 = vmatpush.msra.mxu0 0.0
        %370 = vmatpush.msra.mxu0 0.0
        %371 = vmatpush.msra.mxu0 0.0
        %v372 = vand.u32 %v224, 4294901760
        %373 = vmatpush.msra.mxu0 %v372
        %v374 = vand.u32 %v223, 4294901760
        %375 = vmatpush.msra.mxu0 %v374
        %v376 = vand.u32 %v222, 4294901760
        %377 = vmatpush.msra.mxu0 %v376
        %v378 = vand.u32 %v221, 4294901760
        %379 = vmatpush.msra.mxu0 %v378
        %v380 = vand.u32 %v220, 4294901760
        %381 = vmatpush.msra.mxu0 %v380
        %v382 = vand.u32 %v219, 4294901760
        %383 = vmatpush.msra.mxu0 %v382
        %v384 = vand.u32 %v218, 4294901760
        %385 = vmatpush.msra.mxu0 %v384
        %v386 = vand.u32 %v217, 4294901760
        %387 = vmatpush.msra.mxu0 %v386
        %v388 = vand.u32 %v230, 4294901760
        %v389 = vsub.f32 %v230, %v388
        %v390 = vand.u32 %v389, 4294901760
        %391 = vmatmul.f32.gmra.mxu0 %v390
        %v392 = vpop.f32.mrf.mxu0
        %v393 = vadd.f32 %v362, %v392
        %394 = vdwg.mxu0
        %395 = vmatpush.msra.mxu0 0.0
        %396 = vmatpush.msra.mxu0 0.0
        %397 = vmatpush.msra.mxu0 0.0
        %398 = vmatpush.msra.mxu0 0.0
        %399 = vmatpush.msra.mxu0 0.0
        %400 = vmatpush.msra.mxu0 0.0
        %401 = vmatpush.msra.mxu0 0.0
        %402 = vmatpush.msra.mxu0 0.0
        %v403 = vand.u32 %v224, 4294901760
        %v404 = vsub.f32 %v224, %v403
        %v405 = vand.u32 %v404, 4294901760
        %406 = vmatpush.msra.mxu0 %v405
        %v407 = vand.u32 %v223, 4294901760
        %v408 = vsub.f32 %v223, %v407
        %v409 = vand.u32 %v408, 4294901760
        %410 = vmatpush.msra.mxu0 %v409
        %v411 = vand.u32 %v222, 4294901760
        %v412 = vsub.f32 %v222, %v411
        %v413 = vand.u32 %v412, 4294901760
        %414 = vmatpush.msra.mxu0 %v413
        %v415 = vand.u32 %v221, 4294901760
        %v416 = vsub.f32 %v221, %v415
        %v417 = vand.u32 %v416, 4294901760
        %418 = vmatpush.msra.mxu0 %v417
        %v419 = vand.u32 %v220, 4294901760
        %v420 = vsub.f32 %v220, %v419
        %v421 = vand.u32 %v420, 4294901760
        %422 = vmatpush.msra.mxu0 %v421
        %v423 = vand.u32 %v219, 4294901760
        %v424 = vsub.f32 %v219, %v423
        %v425 = vand.u32 %v424, 4294901760
        %426 = vmatpush.msra.mxu0 %v425
        %v427 = vand.u32 %v218, 4294901760
        %v428 = vsub.f32 %v218, %v427
        %v429 = vand.u32 %v428, 4294901760
        %430 = vmatpush.msra.mxu0 %v429
        %v431 = vand.u32 %v217, 4294901760
        %v432 = vsub.f32 %v217, %v431
        %v433 = vand.u32 %v432, 4294901760
        %434 = vmatpush.msra.mxu0 %v433
        %v435 = vand.u32 %v230, 4294901760
        %436 = vmatmul.f32.gmra.mxu0 %v435
        %v437 = vpop.f32.mrf.mxu0
        %v438 = vadd.f32 %v393, %v437
        %439 = vdwg.mxu0
        %440 = vmatpush.msra.mxu0 0.0
        %441 = vmatpush.msra.mxu0 0.0
        %442 = vmatpush.msra.mxu0 0.0
        %443 = vmatpush.msra.mxu0 0.0
        %444 = vmatpush.msra.mxu0 0.0
        %445 = vmatpush.msra.mxu0 0.0
        %446 = vmatpush.msra.mxu0 0.0
        %447 = vmatpush.msra.mxu0 0.0
        %v448 = vand.u32 %v224, 4294901760
        %449 = vmatpush.msra.mxu0 %v448
        %v450 = vand.u32 %v223, 4294901760
        %451 = vmatpush.msra.mxu0 %v450
        %v452 = vand.u32 %v222, 4294901760
        %453 = vmatpush.msra.mxu0 %v452
        %v454 = vand.u32 %v221, 4294901760
        %455 = vmatpush.msra.mxu0 %v454
        %v456 = vand.u32 %v220, 4294901760
        %457 = vmatpush.msra.mxu0 %v456
        %v458 = vand.u32 %v219, 4294901760
        %459 = vmatpush.msra.mxu0 %v458
        %v460 = vand.u32 %v218, 4294901760
        %461 = vmatpush.msra.mxu0 %v460
        %v462 = vand.u32 %v217, 4294901760
        %463 = vmatpush.msra.mxu0 %v462
        %v464 = vand.u32 %v230, 4294901760
        %465 = vmatmul.f32.gmra.mxu0 %v464
        %v466 = vpop.f32.mrf.mxu0
        %v467 = vadd.f32 %v438, %v466
        %468 = vdwg.mxu0
        %469 = vst [vmem:[%s200] sm:$0xff] %v467
        %s470 = sand.u32 %s110, 1
        %s471 = scalar_lea.sflag [#allocation4], %s470
        %s472 = sand.u32 %s110, 1
        %s473 = smul.addr %s472, 8
        %s474 = scalar_lea.vmem [#allocation5], %s473
        // Predicated region
        $region37: #{tpu_custom_call.1} parent=31 // pred_check
          %p475 = pneg %p120
        $region38: #{tpu_custom_call.1} parent=31 // pred_check_branch
          %477 = sbr.rel (%p475) target = $region40
        $region39: #{tpu_custom_call.1} parent=31 // pred_region
          %479 = vsyncadd %s471, 0
          %s480 = sadd.s32 %s23, %s22
          %s481 = smul.addr %s480, 8
          %s482 = scalar_lea.hbm %s3, %s481
          %s484 = sshll.u32 %s474, 4
          %s485 = int_to_ptr.vmem [resolvable:$true] %s484
          %s486 = sshll.u32 %s482, 4
          %s487 = int_to_ptr.hbm [resolvable:$true] %s486
          %489 = dma.vmem_to_hbm [thread:$0]  %s485, 128, %s487, %s471
        $region40: #{tpu_custom_call.1} parent=31 // pred_fallthru
          _
      $region32: #{tpu_custom_call.1} parent=5 // pred_fallthru
        _
      %p490 = scmp.le.s32.totalorder 2, %s13
      // Predicated region
      $region41: #{tpu_custom_call.1} parent=5 // pred_check
        %p491 = pneg %p490
      $region42: #{tpu_custom_call.1} parent=5 // pred_check_branch
        %493 = sbr.rel (%p491) target = $region44
      $region43: #{tpu_custom_call.1} parent=5 // pred_region
        %s494 = ssub.s32 %s13, 2
        // Predicated region
        $region45: #{tpu_custom_call.1} parent=43 // pred_check
          %p495 = pneg %p126
        $region46: #{tpu_custom_call.1} parent=43 // pred_check_branch
          %497 = sbr.rel (%p495) target = $region48
        $region47: #{tpu_custom_call.1} parent=43 // pred_region
          %s498 = sand.u32 %s111, 1
          %s499 = scalar_lea.sflag [#allocation4], %s498
          %s500 = sand.u32 %s111, 1
          %s501 = smul.addr %s500, 8
          %s502 = scalar_lea.vmem [#allocation5], %s501
          %504 = dma.done %s499, 128
        $region48: #{tpu_custom_call.1} parent=43 // pred_fallthru
          _
      $region44: #{tpu_custom_call.1} parent=5 // pred_fallthru
        _
    $region6: #{tpu_custom_call.1} parent=1 // loop_footer
      %s17 = sadd.s32 1, %s13
    $region7: #{tpu_custom_call.1} parent=1 // loop_footer_branch
      %12 = sbr.rel target = $region3
    $region8: #{tpu_custom_call.1} parent=1 // loop_exit
      _
    %505 = vsyncpa [#allocation3], 1
    %s506 = scalar_lea.sflag [#allocation3], 1
    %507 = vsyncpa %s506, 1
    %508 = vsyncpa [#allocation4], 1
    %s509 = scalar_lea.sflag [#allocation4], 1
    %510 = vsyncpa %s509, 1

</llo_original>
